<compile_context>
chip_gen: v7x
topology: tpu7x:2x2x1
jax: 0.10.0
libtpu: 0.0.40
codegen_flags: <defaults>
</compile_context>

<pallas_src>
import jax
import jax.numpy as jnp
from jax.experimental import pallas as pl
from jax.experimental.pallas import tpu as pltpu

BN_EPS = 1e-5
NEG_SLOPE = 0.2  # nn.LeakyReLU(0.2)
LANE = 128


def _leaky_relu(y):
    # max(y, a*y) == LeakyReLU_a(y) for 0 < a < 1; cheaper than where(cmp, y, a*y).
    return jnp.maximum(y, NEG_SLOPE * y)


# ---------------------------------------------------------------------------
# Fused kernel: all residual blocks + fc_2 on one (C, TILE_P) activation tile.
# ---------------------------------------------------------------------------
def _make_fused_kernel(block_num):
    def kernel(x_ref, w1_ref, b1_ref, w2_ref, b2_ref, wf_ref, bf_ref, o_ref):
        # x_ref: (C, TILE_P) tile; channels on sublanes, (batch*length) on lanes.
        x = x_ref[...].astype(jnp.float32)  # residual carried in f32
        for blk in range(block_num):        # static unroll; block_num is small
            # w1 (Conv1d k=1) with folded BN1
            y = jnp.dot(w1_ref[blk], x.astype(jnp.bfloat16),
                        preferred_element_type=jnp.float32) + b1_ref[blk]
            y = _leaky_relu(y)
            # dropout: eval-mode identity
            # w2 (Conv1d k=1) with folded BN2
            y = jnp.dot(w2_ref[blk], y.astype(jnp.bfloat16),
                        preferred_element_type=jnp.float32) + b2_ref[blk]
            y = _leaky_relu(y)
            x = x + y  # residual, f32
        # fc_2 head
        out = jnp.dot(wf_ref[...], x.astype(jnp.bfloat16),
                      preferred_element_type=jnp.float32) + bf_ref[...]
        o_ref[...] = out.astype(o_ref.dtype)

    return kernel


# ---------------------------------------------------------------------------
# Generation-aware tiling / VMEM budgeting.
# ---------------------------------------------------------------------------
def _tpu_vmem_capacity_bytes():
    try:
        return int(pltpu.get_tpu_info().vmem_capacity_bytes)
    except Exception:
        return 64 << 20  # conservative (v7x-sized) fallback


def _vmem_estimate_bytes(C, Cout, tile_p, block_num, in_bytes, out_bytes):
    # Resident weights/biases: BlockSpec double-buffers every input by default;
    # bias blocks (.., C, 1) pad out to a full 128-wide lane tile in VMEM.
    w_bytes = 2 * (block_num * 2 * C * C * 2 + Cout * C * 2)          # bf16 weights
    b_bytes = 2 * (block_num * 2 * C * LANE * 4 + Cout * LANE * 4)    # f32, lane-padded
    act_bytes = 2 * C * tile_p * in_bytes + 2 * Cout * tile_p * out_bytes
    tmp_bytes = 4 * C * tile_p * 4                                    # f32 x/y temporaries
    return w_bytes + b_bytes + act_bytes + tmp_bytes


def _choose_tile_p(P, C, Cout, block_num, in_bytes, out_bytes, vmem_cap):
    budget = max(vmem_cap - (8 << 20), 16 << 20)
    # 1024-wide tiles only pay off where VMEM is plentiful (v5e/v6e: 128 MiB);
    # cap at 512 on v7x (64 MiB).
    cands = (1024, 512, 256, 128) if vmem_cap >= (100 << 20) else (512, 256, 128)
    fits = [t for t in cands
            if P % t == 0
            and _vmem_estimate_bytes(C, Cout, t, block_num, in_bytes, out_bytes) <= budget]
    if not fits:
        return 128  # see TODO(synk) above: stream weights rather than shrink further
    for t in fits:          # descending: largest tile still giving >=2 grid steps
        if P // t >= 2:     # keep both v7x TensorCores busy
            return t
    return fits[0]


# ---------------------------------------------------------------------------
# Parameters: raw (PyTorch-style) params, then host-side BN folding into W/b.
# ---------------------------------------------------------------------------
def init_raw_params(key, linear_size, channel_out, block_num):
    """Conv1d(k=1) weight stored as (C_out, C_in); BN params as (C,) vectors."""
    C = linear_size
    blocks = []
    for _ in range(block_num):
        key, *ks = jax.random.split(key, 13)
        blocks.append(dict(
            w1=0.1 * jax.random.normal(ks[0], (C, C), jnp.float32),
            b1=0.1 * jax.random.normal(ks[1], (C,), jnp.float32),
            g1=1.0 + 0.1 * jax.random.normal(ks[2], (C,), jnp.float32),
            be1=0.1 * jax.random.normal(ks[3], (C,), jnp.float32),
            m1=0.1 * jax.random.normal(ks[4], (C,), jnp.float32),
            v1=0.5 + jnp.abs(jax.random.normal(ks[5], (C,), jnp.float32)),
            w2=0.1 * jax.random.normal(ks[6], (C, C), jnp.float32),
            b2=0.1 * jax.random.normal(ks[7], (C,), jnp.float32),
            g2=1.0 + 0.1 * jax.random.normal(ks[8], (C,), jnp.float32),
            be2=0.1 * jax.random.normal(ks[9], (C,), jnp.float32),
            m2=0.1 * jax.random.normal(ks[10], (C,), jnp.float32),
            v2=0.5 + jnp.abs(jax.random.normal(ks[11], (C,), jnp.float32)),
        ))
    key, k1, k2 = jax.random.split(key, 3)
    fc2_w = 0.1 * jax.random.normal(k1, (channel_out, C), jnp.float32)
    fc2_b = 0.1 * jax.random.normal(k2, (channel_out,), jnp.float32)
    return dict(blocks=blocks, fc2_w=fc2_w, fc2_b=fc2_b)


def fold_bn_params(raw):
    """Fold eval-mode BN into the conv: W' = diag(s) W, b' = s*(b - m) + beta,
    with s = gamma * rsqrt(var + eps).  Weights stored bf16, biases f32 (C, 1)."""
    def fold(w, b, g, beta, m, v):
        s = g * jax.lax.rsqrt(v + BN_EPS)
        w_f = (w * s[:, None]).astype(jnp.bfloat16)
        b_f = (s * (b - m) + beta).astype(jnp.float32)[:, None]
        return w_f, b_f

    w1s, b1s, w2s, b2s = [], [], [], []
    for blk in raw["blocks"]:
        wf1, bf1 = fold(blk["w1"], blk["b1"], blk["g1"], blk["be1"], blk["m1"], blk["v1"])
        wf2, bf2 = fold(blk["w2"], blk["b2"], blk["g2"], blk["be2"], blk["m2"], blk["v2"])
        w1s.append(wf1); b1s.append(bf1); w2s.append(wf2); b2s.append(bf2)
    return dict(
        w1=jnp.stack(w1s), b1=jnp.stack(b1s),          # (Bn, C, C) bf16 / (Bn, C, 1) f32
        w2=jnp.stack(w2s), b2=jnp.stack(b2s),
        wf=raw["fc2_w"].astype(jnp.bfloat16),          # (Cout, C) bf16
        bf=raw["fc2_b"].astype(jnp.float32)[:, None],  # (Cout, 1) f32
    )


# ---------------------------------------------------------------------------
# Forward
# ---------------------------------------------------------------------------
def fcblock_forward(x_ncl, fused, out_dtype=None):
    """x_ncl: (N, linear_size, L) -> (N, channel_out, L).  Eval-mode semantics."""
    N, C, L = x_ncl.shape
    block_num = fused["w1"].shape[0]
    Cout = fused["wf"].shape[0]
    out_dtype = out_dtype if out_dtype is not None else x_ncl.dtype
    in_bytes = jnp.dtype(x_ncl.dtype).itemsize
    out_bytes = jnp.dtype(out_dtype).itemsize

    # Fold batch & spatial into the lane axis, zero-padded to a 128 multiple, so every
    # store is a lane-dense unmasked vst (k=1 conv is position-wise -> pure layout change).
    NL = N * L
    P = ((NL + LANE - 1) // LANE) * LANE
    x2 = jnp.transpose(x_ncl, (1, 0, 2)).reshape(C, NL)
    if P != NL:
        x2 = jnp.pad(x2, ((0, 0), (0, P - NL)))

    vmem_cap = _tpu_vmem_capacity_bytes()
    tile_p = _choose_tile_p(P, C, Cout, block_num, in_bytes, out_bytes, vmem_cap)
    grid = (P // tile_p,)

    est = _vmem_estimate_bytes(C, Cout, tile_p, block_num, in_bytes, out_bytes)
    vmem_limit = int(min(vmem_cap - (4 << 20), max(est + (4 << 20), 32 << 20)))

    # Advisory cost estimate for XLA's scheduler around the custom call.
    flops = 2 * P * C * (2 * block_num * C + Cout)
    bytes_accessed = (C * P * in_bytes + Cout * P * out_bytes
                      + block_num * 2 * (C * C * 2 + C * 4) + Cout * C * 2 + Cout * 4)

    resident3 = lambda p: (0, 0, 0)
    resident2 = lambda p: (0, 0)

    out2 = pl.pallas_call(
        _make_fused_kernel(block_num),
        out_shape=jax.ShapeDtypeStruct((Cout, P), out_dtype),
        grid=grid,
        in_specs=[
            pl.BlockSpec((C, tile_p), lambda p: (0, p)),   # activation tile
            pl.BlockSpec((block_num, C, C), resident3),    # W1 (BN-folded), bf16
            pl.BlockSpec((block_num, C, 1), resident3),    # b1 (BN-folded), f32
            pl.BlockSpec((block_num, C, C), resident3),    # W2 (BN-folded), bf16
            pl.BlockSpec((block_num, C, 1), resident3),    # b2 (BN-folded), f32
            pl.BlockSpec((Cout, C), resident2),            # fc_2 weight, bf16
            pl.BlockSpec((Cout, 1), resident2),            # fc_2 bias, f32
        ],
        out_specs=pl.BlockSpec((Cout, tile_p), lambda p: (0, p)),
        compiler_params=pltpu.CompilerParams(
            dimension_semantics=("parallel",),
            vmem_limit_bytes=vmem_limit,
        ),
        cost_estimate=pl.CostEstimate(flops=int(flops), transcendentals=0,
                                      bytes_accessed=int(bytes_accessed)),
    )(x2, fused["w1"], fused["b1"], fused["w2"], fused["b2"], fused["wf"], fused["bf"])

    out = out2[:, :NL].reshape(Cout, N, L).transpose(1, 0, 2)
    return out


def fcblock_reference(x_ncl, raw):
    """Pure-JAX f32 reference (eval-mode BN, dropout identity) for validation."""
    def bn(y, m, v, g, be):
        return ((y - m[None, :, None]) * jax.lax.rsqrt(v + BN_EPS)[None, :, None]
                * g[None, :, None] + be[None, :, None])

    x = x_ncl.astype(jnp.float32)
    for blk in raw["blocks"]:
        y = jnp.einsum("oc,ncl->nol", blk["w1"], x) + blk["b1"][None, :, None]
        y = _leaky_relu(bn(y, blk["m1"], blk["v1"], blk["g1"], blk["be1"]))
        y = jnp.einsum("oc,ncl->nol", blk["w2"], y) + blk["b2"][None, :, None]
        y = _leaky_relu(bn(y, blk["m2"], blk["v2"], blk["g2"], blk["be2"]))
        x = x + y
    return jnp.einsum("oc,ncl->nol", raw["fc2_w"], x) + raw["fc2_b"][None, :, None]


if __name__ == "__main__":
    # Small shapes consistent with the module: Conv1d input is (N, C=linear_size, L).
    batch, linear_size, seq = 2, 32, 8
    channel_out, block_num = 16, 2

    key = jax.random.PRNGKey(0)
    key, kx = jax.random.split(key)
    x = jax.random.normal(kx, (batch, linear_size, seq), jnp.float32)

    raw = init_raw_params(key, linear_size, channel_out, block_num)
    fused = fold_bn_params(raw)

    # bf16 activations in and out (residual/accumulation stay f32 inside the kernel).
    x_bf16 = x.astype(jnp.bfloat16)
    out = fcblock_forward(x_bf16, fused, out_dtype=jnp.bfloat16)
    out = jax.block_until_ready(out)

    assert out.shape == (batch, channel_out, seq), out.shape
    out_f32 = out.astype(jnp.float32)
    assert bool(jnp.all(jnp.isfinite(out_f32)))

    ref = fcblock_reference(x_bf16.astype(jnp.float32), raw)
    max_err = float(jnp.max(jnp.abs(out_f32 - ref)))
    assert bool(jnp.allclose(out_f32, ref, rtol=1e-1, atol=1e-1)), max_err

    print("KERNEL_OK")
</pallas_src>

<mosaic_0001>
module attributes {stable_mosaic.version = 11 : i64} {
  func.func @kernel(%arg0: i32, %arg1: memref<32x128xbf16, #tpu.memory_space<vmem>>, %arg2: memref<2x32x32xbf16, #tpu.memory_space<vmem>>, %arg3: memref<2x32x1xf32, #tpu.memory_space<vmem>>, %arg4: memref<2x32x32xbf16, #tpu.memory_space<vmem>>, %arg5: memref<2x32x1xf32, #tpu.memory_space<vmem>>, %arg6: memref<16x32xbf16, #tpu.memory_space<vmem>>, %arg7: memref<16x1xf32, #tpu.memory_space<vmem>>, %arg8: memref<16x128xbf16, #tpu.memory_space<vmem>>) attributes {dimension_semantics = [#tpu.dimension_semantics<parallel>], iteration_bounds = array<i64: 1>, scalar_prefetch = 0 : i64, scratch_operands = 0 : i64, tpu.core_type = #tpu.core_type<tc>, window_params = [{transform_indices = @transform_0, window_bounds = array<i64: 32, 128>}, {pipeline_mode = #tpu.pipeline_mode<synchronous>, transform_indices = @transform_1, window_bounds = array<i64: 2, 32, 32>}, {pipeline_mode = #tpu.pipeline_mode<synchronous>, transform_indices = @transform_2, window_bounds = array<i64: 2, 32, 1>}, {pipeline_mode = #tpu.pipeline_mode<synchronous>, transform_indices = @transform_3, window_bounds = array<i64: 2, 32, 32>}, {pipeline_mode = #tpu.pipeline_mode<synchronous>, transform_indices = @transform_4, window_bounds = array<i64: 2, 32, 1>}, {pipeline_mode = #tpu.pipeline_mode<synchronous>, transform_indices = @transform_5, window_bounds = array<i64: 16, 32>}, {pipeline_mode = #tpu.pipeline_mode<synchronous>, transform_indices = @transform_6, window_bounds = array<i64: 16, 1>}, {transform_indices = @transform_7, window_bounds = array<i64: 16, 128>}]} {
    %c0 = arith.constant 0 : index
    %c0_0 = arith.constant 0 : index
    %0 = vector.load %arg1[%c0, %c0_0] : memref<32x128xbf16, #tpu.memory_space<vmem>>, vector<32x128xbf16>
    %1 = arith.extf %0 : vector<32x128xbf16> to vector<32x128xf32>
    %c0_1 = arith.constant 0 : index
    %c0_2 = arith.constant 0 : index
    %c0_3 = arith.constant 0 : index
    %2 = vector.load %arg2[%c0_1, %c0_2, %c0_3] : memref<2x32x32xbf16, #tpu.memory_space<vmem>>, vector<1x32x32xbf16>
    %3 = vector.shape_cast %2 : vector<1x32x32xbf16> to vector<32x32xbf16>
    %4 = arith.truncf %1 : vector<32x128xf32> to vector<32x128xbf16>
    %cst = arith.constant dense<0.000000e+00> : vector<32x128xf32>
    %5 = tpu.matmul %3, %4, %cst {dimension_numbers = #tpu.dot_dimension_numbers<[1], [0], [0], [1], [0, 0, 1, 1], [], []>} : vector<32x32xbf16>, vector<32x128xbf16>, vector<32x128xf32> -> vector<32x128xf32>
    %c0_4 = arith.constant 0 : index
    %c0_5 = arith.constant 0 : index
    %c0_6 = arith.constant 0 : index
    %6 = vector.load %arg3[%c0_4, %c0_5, %c0_6] : memref<2x32x1xf32, #tpu.memory_space<vmem>>, vector<1x32x1xf32>
    %7 = vector.shape_cast %6 : vector<1x32x1xf32> to vector<32x1xf32>
    %8 = vector.broadcast %7 : vector<32x1xf32> to vector<32x128xf32>
    %9 = arith.addf %5, %8 : vector<32x128xf32>
    %cst_7 = arith.constant 2.000000e-01 : f32
    %10 = vector.broadcast %cst_7 : f32 to vector<32x128xf32>
    %11 = arith.mulf %10, %9 : vector<32x128xf32>
    %12 = arith.maximumf %9, %11 : vector<32x128xf32>
    %c0_8 = arith.constant 0 : index
    %c0_9 = arith.constant 0 : index
    %c0_10 = arith.constant 0 : index
    %13 = vector.load %arg4[%c0_8, %c0_9, %c0_10] : memref<2x32x32xbf16, #tpu.memory_space<vmem>>, vector<1x32x32xbf16>
    %14 = vector.shape_cast %13 : vector<1x32x32xbf16> to vector<32x32xbf16>
    %15 = arith.truncf %12 : vector<32x128xf32> to vector<32x128xbf16>
    %cst_11 = arith.constant dense<0.000000e+00> : vector<32x128xf32>
    %16 = tpu.matmul %14, %15, %cst_11 {dimension_numbers = #tpu.dot_dimension_numbers<[1], [0], [0], [1], [0, 0, 1, 1], [], []>} : vector<32x32xbf16>, vector<32x128xbf16>, vector<32x128xf32> -> vector<32x128xf32>
    %c0_12 = arith.constant 0 : index
    %c0_13 = arith.constant 0 : index
    %c0_14 = arith.constant 0 : index
    %17 = vector.load %arg5[%c0_12, %c0_13, %c0_14] : memref<2x32x1xf32, #tpu.memory_space<vmem>>, vector<1x32x1xf32>
    %18 = vector.shape_cast %17 : vector<1x32x1xf32> to vector<32x1xf32>
    %19 = vector.broadcast %18 : vector<32x1xf32> to vector<32x128xf32>
    %20 = arith.addf %16, %19 : vector<32x128xf32>
    %cst_15 = arith.constant 2.000000e-01 : f32
    %21 = vector.broadcast %cst_15 : f32 to vector<32x128xf32>
    %22 = arith.mulf %21, %20 : vector<32x128xf32>
    %23 = arith.maximumf %20, %22 : vector<32x128xf32>
    %24 = arith.addf %1, %23 : vector<32x128xf32>
    %c1 = arith.constant 1 : index
    %c0_16 = arith.constant 0 : index
    %c0_17 = arith.constant 0 : index
    %25 = vector.load %arg2[%c1, %c0_16, %c0_17] : memref<2x32x32xbf16, #tpu.memory_space<vmem>>, vector<1x32x32xbf16>
    %26 = vector.shape_cast %25 : vector<1x32x32xbf16> to vector<32x32xbf16>
    %27 = arith.truncf %24 : vector<32x128xf32> to vector<32x128xbf16>
    %cst_18 = arith.constant dense<0.000000e+00> : vector<32x128xf32>
    %28 = tpu.matmul %26, %27, %cst_18 {dimension_numbers = #tpu.dot_dimension_numbers<[1], [0], [0], [1], [0, 0, 1, 1], [], []>} : vector<32x32xbf16>, vector<32x128xbf16>, vector<32x128xf32> -> vector<32x128xf32>
    %c1_19 = arith.constant 1 : index
    %c0_20 = arith.constant 0 : index
    %c0_21 = arith.constant 0 : index
    %29 = vector.load %arg3[%c1_19, %c0_20, %c0_21] : memref<2x32x1xf32, #tpu.memory_space<vmem>>, vector<1x32x1xf32>
    %30 = vector.shape_cast %29 : vector<1x32x1xf32> to vector<32x1xf32>
    %31 = vector.broadcast %30 : vector<32x1xf32> to vector<32x128xf32>
    %32 = arith.addf %28, %31 : vector<32x128xf32>
    %cst_22 = arith.constant 2.000000e-01 : f32
    %33 = vector.broadcast %cst_22 : f32 to vector<32x128xf32>
    %34 = arith.mulf %33, %32 : vector<32x128xf32>
    %35 = arith.maximumf %32, %34 : vector<32x128xf32>
    %c1_23 = arith.constant 1 : index
    %c0_24 = arith.constant 0 : index
    %c0_25 = arith.constant 0 : index
    %36 = vector.load %arg4[%c1_23, %c0_24, %c0_25] : memref<2x32x32xbf16, #tpu.memory_space<vmem>>, vector<1x32x32xbf16>
    %37 = vector.shape_cast %36 : vector<1x32x32xbf16> to vector<32x32xbf16>
    %38 = arith.truncf %35 : vector<32x128xf32> to vector<32x128xbf16>
    %cst_26 = arith.constant dense<0.000000e+00> : vector<32x128xf32>
    %39 = tpu.matmul %37, %38, %cst_26 {dimension_numbers = #tpu.dot_dimension_numbers<[1], [0], [0], [1], [0, 0, 1, 1], [], []>} : vector<32x32xbf16>, vector<32x128xbf16>, vector<32x128xf32> -> vector<32x128xf32>
    %c1_27 = arith.constant 1 : index
    %c0_28 = arith.constant 0 : index
    %c0_29 = arith.constant 0 : index
    %40 = vector.load %arg5[%c1_27, %c0_28, %c0_29] : memref<2x32x1xf32, #tpu.memory_space<vmem>>, vector<1x32x1xf32>
    %41 = vector.shape_cast %40 : vector<1x32x1xf32> to vector<32x1xf32>
    %42 = vector.broadcast %41 : vector<32x1xf32> to vector<32x128xf32>
    %43 = arith.addf %39, %42 : vector<32x128xf32>
    %cst_30 = arith.constant 2.000000e-01 : f32
    %44 = vector.broadcast %cst_30 : f32 to vector<32x128xf32>
    %45 = arith.mulf %44, %43 : vector<32x128xf32>
    %46 = arith.maximumf %43, %45 : vector<32x128xf32>
    %47 = arith.addf %24, %46 : vector<32x128xf32>
    %c0_31 = arith.constant 0 : index
    %c0_32 = arith.constant 0 : index
    %48 = vector.load %arg6[%c0_31, %c0_32] : memref<16x32xbf16, #tpu.memory_space<vmem>>, vector<16x32xbf16>
    %49 = arith.truncf %47 : vector<32x128xf32> to vector<32x128xbf16>
    %cst_33 = arith.constant dense<0.000000e+00> : vector<16x128xf32>
    %50 = tpu.matmul %48, %49, %cst_33 {dimension_numbers = #tpu.dot_dimension_numbers<[1], [0], [0], [1], [0, 0, 1, 1], [], []>} : vector<16x32xbf16>, vector<32x128xbf16>, vector<16x128xf32> -> vector<16x128xf32>
    %c0_34 = arith.constant 0 : index
    %c0_35 = arith.constant 0 : index
    %51 = vector.load %arg7[%c0_34, %c0_35] : memref<16x1xf32, #tpu.memory_space<vmem>>, vector<16x1xf32>
    %52 = vector.broadcast %51 : vector<16x1xf32> to vector<16x128xf32>
    %53 = arith.addf %50, %52 : vector<16x128xf32>
    %54 = arith.truncf %53 : vector<16x128xf32> to vector<16x128xbf16>
    %c0_36 = arith.constant 0 : index
    %c0_37 = arith.constant 0 : index
    %55 = vector.load %arg8[%c0_36, %c0_37] : memref<16x128xbf16, #tpu.memory_space<vmem>>, vector<16x128xbf16>
    tpu.vector_store %arg8[%c0_36, %c0_37], %54 {strides = array<i32>} : memref<16x128xbf16, #tpu.memory_space<vmem>>, vector<16x128xbf16>,
    return
  }
  func.func @transform_0(%arg0: i32) -> (i32, i32) {
    %c0_i32 = arith.constant 0 : i32
    %c0_i32_0 = arith.constant 0 : i32
    return %c0_i32, %arg0 : i32, i32
  }
  func.func @transform_1(%arg0: i32) -> (i32, i32, i32) {
    %c0_i32 = arith.constant 0 : i32
    %c0_i32_0 = arith.constant 0 : i32
    %c0_i32_1 = arith.constant 0 : i32
    %c0_i32_2 = arith.constant 0 : i32
    return %c0_i32, %c0_i32_0, %c0_i32_1 : i32, i32, i32
  }
  func.func @transform_2(%arg0: i32) -> (i32, i32, i32) {
    %c0_i32 = arith.constant 0 : i32
    %c0_i32_0 = arith.constant 0 : i32
    %c0_i32_1 = arith.constant 0 : i32
    %c0_i32_2 = arith.constant 0 : i32
    return %c0_i32, %c0_i32_0, %c0_i32_1 : i32, i32, i32
  }
  func.func @transform_3(%arg0: i32) -> (i32, i32, i32) {
    %c0_i32 = arith.constant 0 : i32
    %c0_i32_0 = arith.constant 0 : i32
    %c0_i32_1 = arith.constant 0 : i32
    %c0_i32_2 = arith.constant 0 : i32
    return %c0_i32, %c0_i32_0, %c0_i32_1 : i32, i32, i32
  }
  func.func @transform_4(%arg0: i32) -> (i32, i32, i32) {
    %c0_i32 = arith.constant 0 : i32
    %c0_i32_0 = arith.constant 0 : i32
    %c0_i32_1 = arith.constant 0 : i32
    %c0_i32_2 = arith.constant 0 : i32
    return %c0_i32, %c0_i32_0, %c0_i32_1 : i32, i32, i32
  }
  func.func @transform_5(%arg0: i32) -> (i32, i32) {
    %c0_i32 = arith.constant 0 : i32
    %c0_i32_0 = arith.constant 0 : i32
    %c0_i32_1 = arith.constant 0 : i32
    return %c0_i32, %c0_i32_0 : i32, i32
  }
  func.func @transform_6(%arg0: i32) -> (i32, i32) {
    %c0_i32 = arith.constant 0 : i32
    %c0_i32_0 = arith.constant 0 : i32
    %c0_i32_1 = arith.constant 0 : i32
    return %c0_i32, %c0_i32_0 : i32, i32
  }
  func.func @transform_7(%arg0: i32) -> (i32, i32) {
    %c0_i32 = arith.constant 0 : i32
    %c0_i32_0 = arith.constant 0 : i32
    return %c0_i32, %arg0 : i32, i32
  }
}

</mosaic_0001>

<llo_original>
// kernel: tpu_custom_call.1
$region0: #{tpu_custom_call.1}
  #allocation0 [shape = 'u32[]', space=smem, size = 0x4, offset = 0x4, fixed_abs, tag = 'smem constant byte address 0x4 - core index']
  #allocation1 [shape = 'u32[144,128]{1,0:T(1,128)}', space=vmem, size = 0x12000, scoped, tag = 'internal scratch']
  %s0 = inlined_call_operand.vmem [shape: bf16[32,128], index: 0, kind: input, shape index: {}]
  %s1 = inlined_call_operand.vmem [shape: bf16[2,32,32], index: 1, kind: input, shape index: {}]
  %s2 = inlined_call_operand.vmem [shape: f32[2,32,1], index: 2, kind: input, shape index: {}]
  %s3 = inlined_call_operand.vmem [shape: bf16[2,32,32], index: 3, kind: input, shape index: {}]
  %s4 = inlined_call_operand.vmem [shape: f32[2,32,1], index: 4, kind: input, shape index: {}]
  %s5 = inlined_call_operand.vmem [shape: bf16[16,32], index: 5, kind: input, shape index: {}]
  %s6 = inlined_call_operand.vmem [shape: f32[16,1], index: 6, kind: input, shape index: {}]
  %s7 = inlined_call_operand.hbm [shape: bf16[16,128], index: 7, kind: output, shape index: {}]
  %s8 = sld [smem:[#allocation0]]
  $region38: #{tpu_custom_call.1} parent=0
    _
  %s10 = ssub.s32 1, %s8
  %s11 = scalar_select 0, %s10, %s8
  $region1: #{tpu_custom_call.1} parent=0
    #allocation2 [shape = 'u8[4096]{0}', space=vmem, size = 0x1000, scoped, tag = 'output window, operand 0, single buffered']
    #allocation3 [shape = 's32[1]{0}', space=sflag, size = 0x4, scoped, tag = 'scoped memory for tpu_custom_call.1']
    %12 = vsyncpa [#allocation3], 0
    // Predicated region
    $region2: #{tpu_custom_call.1} parent=1 // pred_check
      _
    $region3: #{tpu_custom_call.1} parent=1 // pred_check_branch
      %14 = sbr.rel (0) target = $region5
    $region4: #{tpu_custom_call.1} parent=1 // pred_region
      _
    $region5: #{tpu_custom_call.1} parent=1 // pred_fallthru
      _
    // Predicated region
    $region6: #{tpu_custom_call.1} parent=1 // pred_check
      _
    $region7: #{tpu_custom_call.1} parent=1 // pred_check_branch
      %16 = sbr.rel (0) target = $region9
    $region8: #{tpu_custom_call.1} parent=1 // pred_region
      _
    $region9: #{tpu_custom_call.1} parent=1 // pred_fallthru
      _
    // Predicated region
    $region10: #{tpu_custom_call.1} parent=1 // pred_check
      _
    $region11: #{tpu_custom_call.1} parent=1 // pred_check_branch
      %18 = sbr.rel (0) target = $region13
    $region12: #{tpu_custom_call.1} parent=1 // pred_region
      _
    $region13: #{tpu_custom_call.1} parent=1 // pred_fallthru
      _
    // Predicated region
    $region14: #{tpu_custom_call.1} parent=1 // pred_check
      _
    $region15: #{tpu_custom_call.1} parent=1 // pred_check_branch
      %20 = sbr.rel (0) target = $region17
    $region16: #{tpu_custom_call.1} parent=1 // pred_region
      _
    $region17: #{tpu_custom_call.1} parent=1 // pred_fallthru
      _
    // Predicated region
    $region18: #{tpu_custom_call.1} parent=1 // pred_check
      _
    $region19: #{tpu_custom_call.1} parent=1 // pred_check_branch
      %22 = sbr.rel (0) target = $region21
    $region20: #{tpu_custom_call.1} parent=1 // pred_region
      _
    $region21: #{tpu_custom_call.1} parent=1 // pred_fallthru
      _
    // Predicated region
    $region22: #{tpu_custom_call.1} parent=1 // pred_check
      _
    $region23: #{tpu_custom_call.1} parent=1 // pred_check_branch
      %24 = sbr.rel (0) target = $region25
    $region24: #{tpu_custom_call.1} parent=1 // pred_region
      _
    $region25: #{tpu_custom_call.1} parent=1 // pred_fallthru
      _
    // Predicated region
    $region26: #{tpu_custom_call.1} parent=1 // pred_check
      _
    $region27: #{tpu_custom_call.1} parent=1 // pred_check_branch
      %26 = sbr.rel (0) target = $region29
    $region28: #{tpu_custom_call.1} parent=1 // pred_region
      _
    $region29: #{tpu_custom_call.1} parent=1 // pred_fallthru
      _
    %v28 = vld [vmem:[%s0] sm:$0xf]
    %v29 = vld [vmem:[%s0 + $0x4] sm:$0xf]
    %v30 = vld [vmem:[%s0 + $0x8] sm:$0xf]
    %v31 = vld [vmem:[%s0 + $0xc] sm:$0xf]
    %v32 = vunpack.c.l.bf16 %v28
    %v33 = vunpack.c.l.bf16 %v29
    %v34 = vunpack.c.l.bf16 %v30
    %v35 = vunpack.c.l.bf16 %v31
    %v36 = vld [vmem:[%s1] sm:$0xf]
    %v37 = vld [vmem:[%s1 + $0x4] sm:$0xf]
    %v38 = vld [vmem:[%s1 + $0x8] sm:$0xf]
    %v39 = vld [vmem:[%s1 + $0xc] sm:$0xf]
    %v40 = vld [vmem:[%s2] sm:$0xff]
    %v41 = vld [vmem:[%s2 + $0x8] sm:$0xff]
    %v42 = vld [vmem:[%s2 + $0x10] sm:$0xff]
    %v43 = vld [vmem:[%s2 + $0x18] sm:$0xff]
    %45 = vset.pattern.permute.xlu0 0
    %46 = vperm.xlu0 %45, %v40
    %v47 = vpop.permute.xlu0 %46
    %50 = vset.pattern.permute.xlu0 0
    %51 = vperm.xlu0 %50, %v41
    %v52 = vpop.permute.xlu0 %51
    %55 = vset.pattern.permute.xlu0 0
    %56 = vperm.xlu0 %55, %v42
    %v57 = vpop.permute.xlu0 %56
    %60 = vset.pattern.permute.xlu0 0
    %61 = vperm.xlu0 %60, %v43
    %v62 = vpop.permute.xlu0 %61
    %v68 = vunpack.c.l.b16 %v36
    %v69 = vunpack.c.l.b16 %v37
    %v70 = vunpack.c.l.b16 %v38
    %v71 = vunpack.c.l.b16 %v39
    %v72 = vpack.c.b16 %v69, %v68
    %v73 = vpack.c.b16 %v71, %v70
    %v78 = vunpack.c.l.b16 %v28
    %v79 = vunpack.c.l.b16 %v29
    %v80 = vunpack.c.l.b16 %v30
    %v81 = vunpack.c.l.b16 %v31
    %v82 = vpack.c.b16 %v79, %v78
    %v83 = vpack.c.b16 %v81, %v80
    %vm86 = vcmask 261120
    %v88 = vsel %vm86, %v72, 0
    %v91 = vsel %vm86, %v73, 0
    %93 = vmatprep.subr.bf16.mxu0 0
    %94 = vmatpush1.bf16.msra.mxu0 %v82
    %95 = vmatprep.subr.bf16.mxu0 0
    %96 = vmatpush1.bf16.msra.mxu0 %v83
    %97 = vmatprep.subr.bf16.mxu0 0
    %98 = vmatpush1.bf16.msra.mxu0 0
    %99 = vmatprep.subr.bf16.mxu0 0
    %100 = vmatpush1.bf16.msra.mxu0 0
    %101 = vmatprep.subr.bf16.mxu0 0
    %102 = vmatpush1.bf16.msra.mxu0 0
    %103 = vmatprep.subr.bf16.mxu0 0
    %104 = vmatpush1.bf16.msra.mxu0 0
    %105 = vmatprep.subr.bf16.mxu0 0
    %106 = vmatpush1.bf16.msra.mxu0 0
    %107 = vmatprep.subr.bf16.mxu0 0
    %108 = vmatpush1.bf16.msra.mxu0 0
    %109 = vmatprep.subr.bf16.mxu0 0
    %110 = vmatpush1.bf16.msra.mxu0 0
    %111 = vmatprep.subr.bf16.mxu0 0
    %112 = vmatpush1.bf16.msra.mxu0 0
    %113 = vmatprep.subr.bf16.mxu0 0
    %114 = vmatpush1.bf16.msra.mxu0 0
    %115 = vmatprep.subr.bf16.mxu0 0
    %116 = vmatpush1.bf16.msra.mxu0 0
    %117 = vmatprep.subr.bf16.mxu0 0
    %118 = vmatpush1.bf16.msra.mxu0 0
    %119 = vmatprep.subr.bf16.mxu0 0
    %120 = vmatpush1.bf16.msra.mxu0 0
    %121 = vmatprep.subr.bf16.mxu0 0
    %122 = vmatpush1.bf16.msra.mxu0 0
    %123 = vmatprep.subr.bf16.mxu0 0
    %124 = vmatpush1.bf16.msra.mxu0 0
    %125 = vmatprep.mubr.bf16.mxu0 0
    %126 = vmatmul.mubr.bf16.gmra.mrb[0].mxu0 %v88
    %v127 = vpop.f32.mrb[0].mxu0
    %v128 = vadd.f32 %v47, %v127
    %v129 = vpop.f32.mrb[0].mxu0
    %v130 = vpop.f32.mrb[0].mxu0
    %v131 = vadd.f32 %v52, %v130
    %v132 = vpop.f32.mrb[0].mxu0
    %133 = vmatprep.mubr.bf16.mxu0 0
    %134 = vmatmul.mubr.bf16.gmra.mrb[0].mxu0 %v91
    %v135 = vpop.f32.mrb[0].mxu0
    %v136 = vadd.f32 %v57, %v135
    %v137 = vpop.f32.mrb[0].mxu0
    %v138 = vpop.f32.mrb[0].mxu0
    %v139 = vadd.f32 %v62, %v138
    %v140 = vpop.f32.mrb[0].mxu0
    %141 = vdwg.mxu0
    %v142 = vmul.f32 %v128, 0.2
    %v143 = vmul.f32 %v131, 0.2
    %v144 = vmul.f32 %v136, 0.2
    %v145 = vmul.f32 %v139, 0.2
    %v146 = vmax.f32 %v128, %v142
    %v147 = vmax.f32 %v131, %v143
    %v148 = vmax.f32 %v136, %v144
    %v149 = vmax.f32 %v139, %v145
    %v150 = vld [vmem:[%s3] sm:$0xf]
    %v151 = vld [vmem:[%s3 + $0x4] sm:$0xf]
    %v152 = vld [vmem:[%s3 + $0x8] sm:$0xf]
    %v153 = vld [vmem:[%s3 + $0xc] sm:$0xf]
    %v154 = vpack.c.bf16 %v147, %v146
    %v155 = vpack.c.bf16 %v149, %v148
    %v156 = vld [vmem:[%s4] sm:$0xff]
    %v157 = vld [vmem:[%s4 + $0x8] sm:$0xff]
    %v158 = vld [vmem:[%s4 + $0x10] sm:$0xff]
    %v159 = vld [vmem:[%s4 + $0x18] sm:$0xff]
    %161 = vset.pattern.permute.xlu0 0
    %162 = vperm.xlu0 %161, %v156
    %v163 = vpop.permute.xlu0 %162
    %166 = vset.pattern.permute.xlu0 0
    %167 = vperm.xlu0 %166, %v157
    %v168 = vpop.permute.xlu0 %167
    %171 = vset.pattern.permute.xlu0 0
    %172 = vperm.xlu0 %171, %v158
    %v173 = vpop.permute.xlu0 %172
    %176 = vset.pattern.permute.xlu0 0
    %177 = vperm.xlu0 %176, %v159
    %v178 = vpop.permute.xlu0 %177
    %v184 = vunpack.c.l.b16 %v150
    %v185 = vunpack.c.l.b16 %v151
    %v186 = vunpack.c.l.b16 %v152
    %v187 = vunpack.c.l.b16 %v153
    %v188 = vpack.c.b16 %v185, %v184
    %v189 = vpack.c.b16 %v187, %v186
    %v191 = vsel %vm86, %v188, 0
    %v194 = vsel %vm86, %v189, 0
    %196 = vmatprep.subr.bf16.mxu0 0
    %197 = vmatpush1.bf16.msra.mxu0 %v154
    %198 = vmatprep.subr.bf16.mxu0 0
    %199 = vmatpush1.bf16.msra.mxu0 %v155
    %200 = vmatprep.subr.bf16.mxu0 0
    %201 = vmatpush1.bf16.msra.mxu0 0
    %202 = vmatprep.subr.bf16.mxu0 0
    %203 = vmatpush1.bf16.msra.mxu0 0
    %204 = vmatprep.subr.bf16.mxu0 0
    %205 = vmatpush1.bf16.msra.mxu0 0
    %206 = vmatprep.subr.bf16.mxu0 0
    %207 = vmatpush1.bf16.msra.mxu0 0
    %208 = vmatprep.subr.bf16.mxu0 0
    %209 = vmatpush1.bf16.msra.mxu0 0
    %210 = vmatprep.subr.bf16.mxu0 0
    %211 = vmatpush1.bf16.msra.mxu0 0
    %212 = vmatprep.subr.bf16.mxu0 0
    %213 = vmatpush1.bf16.msra.mxu0 0
    %214 = vmatprep.subr.bf16.mxu0 0
    %215 = vmatpush1.bf16.msra.mxu0 0
    %216 = vmatprep.subr.bf16.mxu0 0
    %217 = vmatpush1.bf16.msra.mxu0 0
    %218 = vmatprep.subr.bf16.mxu0 0
    %219 = vmatpush1.bf16.msra.mxu0 0
    %220 = vmatprep.subr.bf16.mxu0 0
    %221 = vmatpush1.bf16.msra.mxu0 0
    %222 = vmatprep.subr.bf16.mxu0 0
    %223 = vmatpush1.bf16.msra.mxu0 0
    %224 = vmatprep.subr.bf16.mxu0 0
    %225 = vmatpush1.bf16.msra.mxu0 0
    %226 = vmatprep.subr.bf16.mxu0 0
    %227 = vmatpush1.bf16.msra.mxu0 0
    %228 = vmatprep.mubr.bf16.mxu0 0
    %229 = vmatmul.mubr.bf16.gmra.mrb[0].mxu0 %v191
    %v230 = vpop.f32.mrb[0].mxu0
    %v231 = vadd.f32 %v163, %v230
    %v232 = vpop.f32.mrb[0].mxu0
    %v233 = vpop.f32.mrb[0].mxu0
    %v234 = vadd.f32 %v168, %v233
    %v235 = vpop.f32.mrb[0].mxu0
    %236 = vmatprep.mubr.bf16.mxu0 0
    %237 = vmatmul.mubr.bf16.gmra.mrb[0].mxu0 %v194
    %v238 = vpop.f32.mrb[0].mxu0
    %v239 = vadd.f32 %v173, %v238
    %v240 = vpop.f32.mrb[0].mxu0
    %v241 = vpop.f32.mrb[0].mxu0
    %v242 = vadd.f32 %v178, %v241
    %v243 = vpop.f32.mrb[0].mxu0
    %244 = vdwg.mxu0
    %v245 = vmul.f32 %v231, 0.2
    %v246 = vmul.f32 %v234, 0.2
    %v247 = vmul.f32 %v239, 0.2
    %v248 = vmul.f32 %v242, 0.2
    %v249 = vmax.f32 %v231, %v245
    %v250 = vmax.f32 %v234, %v246
    %v251 = vmax.f32 %v239, %v247
    %v252 = vmax.f32 %v242, %v248
    %v253 = vadd.f32 %v32, %v249
    %v254 = vadd.f32 %v33, %v250
    %v255 = vadd.f32 %v34, %v251
    %v256 = vadd.f32 %v35, %v252
    %s257 = scalar_lea.vmem %s1, 16
    %v258 = vld [vmem:[%s257] sm:$0xf]
    %v259 = vld [vmem:[%s257 + $0x4] sm:$0xf]
    %v260 = vld [vmem:[%s257 + $0x8] sm:$0xf]
    %v261 = vld [vmem:[%s257 + $0xc] sm:$0xf]
    %v262 = vpack.c.bf16 %v254, %v253
    %v263 = vpack.c.bf16 %v256, %v255
    %s264 = scalar_lea.vmem %s2, 32
    %v265 = vld [vmem:[%s264] sm:$0xff]
    %v266 = vld [vmem:[%s264 + $0x8] sm:$0xff]
    %v267 = vld [vmem:[%s264 + $0x10] sm:$0xff]
    %v268 = vld [vmem:[%s264 + $0x18] sm:$0xff]
    %270 = vset.pattern.permute.xlu0 0
    %271 = vperm.xlu0 %270, %v265
    %v272 = vpop.permute.xlu0 %271
    %275 = vset.pattern.permute.xlu0 0
    %276 = vperm.xlu0 %275, %v266
    %v277 = vpop.permute.xlu0 %276
    %280 = vset.pattern.permute.xlu0 0
    %281 = vperm.xlu0 %280, %v267
    %v282 = vpop.permute.xlu0 %281
    %285 = vset.pattern.permute.xlu0 0
    %286 = vperm.xlu0 %285, %v268
    %v287 = vpop.permute.xlu0 %286
    %v293 = vunpack.c.l.b16 %v258
    %v294 = vunpack.c.l.b16 %v259
    %v295 = vunpack.c.l.b16 %v260
    %v296 = vunpack.c.l.b16 %v261
    %v297 = vpack.c.b16 %v294, %v293
    %v298 = vpack.c.b16 %v296, %v295
    %v300 = vsel %vm86, %v297, 0
    %v303 = vsel %vm86, %v298, 0
    %305 = vmatprep.subr.bf16.mxu0 0
    %306 = vmatpush1.bf16.msra.mxu0 %v262
    %307 = vmatprep.subr.bf16.mxu0 0
    %308 = vmatpush1.bf16.msra.mxu0 %v263
    %309 = vmatprep.subr.bf16.mxu0 0
    %310 = vmatpush1.bf16.msra.mxu0 0
    %311 = vmatprep.subr.bf16.mxu0 0
    %312 = vmatpush1.bf16.msra.mxu0 0
    %313 = vmatprep.subr.bf16.mxu0 0
    %314 = vmatpush1.bf16.msra.mxu0 0
    %315 = vmatprep.subr.bf16.mxu0 0
    %316 = vmatpush1.bf16.msra.mxu0 0
    %317 = vmatprep.subr.bf16.mxu0 0
    %318 = vmatpush1.bf16.msra.mxu0 0
    %319 = vmatprep.subr.bf16.mxu0 0
    %320 = vmatpush1.bf16.msra.mxu0 0
    %321 = vmatprep.subr.bf16.mxu0 0
    %322 = vmatpush1.bf16.msra.mxu0 0
    %323 = vmatprep.subr.bf16.mxu0 0
    %324 = vmatpush1.bf16.msra.mxu0 0
    %325 = vmatprep.subr.bf16.mxu0 0
    %326 = vmatpush1.bf16.msra.mxu0 0
    %327 = vmatprep.subr.bf16.mxu0 0
    %328 = vmatpush1.bf16.msra.mxu0 0
    %329 = vmatprep.subr.bf16.mxu0 0
    %330 = vmatpush1.bf16.msra.mxu0 0
    %331 = vmatprep.subr.bf16.mxu0 0
    %332 = vmatpush1.bf16.msra.mxu0 0
    %333 = vmatprep.subr.bf16.mxu0 0
    %334 = vmatpush1.bf16.msra.mxu0 0
    %335 = vmatprep.subr.bf16.mxu0 0
    %336 = vmatpush1.bf16.msra.mxu0 0
    %337 = vmatprep.mubr.bf16.mxu0 0
    %338 = vmatmul.mubr.bf16.gmra.mrb[0].mxu0 %v300
    %v339 = vpop.f32.mrb[0].mxu0
    %v340 = vadd.f32 %v272, %v339
    %v341 = vpop.f32.mrb[0].mxu0
    %v342 = vpop.f32.mrb[0].mxu0
    %v343 = vadd.f32 %v277, %v342
    %v344 = vpop.f32.mrb[0].mxu0
    %345 = vmatprep.mubr.bf16.mxu0 0
    %346 = vmatmul.mubr.bf16.gmra.mrb[0].mxu0 %v303
    %v347 = vpop.f32.mrb[0].mxu0
    %v348 = vadd.f32 %v282, %v347
    %v349 = vpop.f32.mrb[0].mxu0
    %v350 = vpop.f32.mrb[0].mxu0
    %v351 = vadd.f32 %v287, %v350
    %v352 = vpop.f32.mrb[0].mxu0
    %353 = vdwg.mxu0
    %v354 = vmul.f32 %v340, 0.2
    %v355 = vmul.f32 %v343, 0.2
    %v356 = vmul.f32 %v348, 0.2
    %v357 = vmul.f32 %v351, 0.2
    %v358 = vmax.f32 %v340, %v354
    %v359 = vmax.f32 %v343, %v355
    %v360 = vmax.f32 %v348, %v356
    %v361 = vmax.f32 %v351, %v357
    %s362 = scalar_lea.vmem %s3, 16
    %v363 = vld [vmem:[%s362] sm:$0xf]
    %v364 = vld [vmem:[%s362 + $0x4] sm:$0xf]
    %v365 = vld [vmem:[%s362 + $0x8] sm:$0xf]
    %v366 = vld [vmem:[%s362 + $0xc] sm:$0xf]
    %v367 = vpack.c.bf16 %v359, %v358
    %v368 = vpack.c.bf16 %v361, %v360
    %s369 = scalar_lea.vmem %s4, 32
    %v370 = vld [vmem:[%s369] sm:$0xff]
    %v371 = vld [vmem:[%s369 + $0x8] sm:$0xff]
    %v372 = vld [vmem:[%s369 + $0x10] sm:$0xff]
    %v373 = vld [vmem:[%s369 + $0x18] sm:$0xff]
    %375 = vset.pattern.permute.xlu0 0
    %376 = vperm.xlu0 %375, %v370
    %v377 = vpop.permute.xlu0 %376
    %380 = vset.pattern.permute.xlu0 0
    %381 = vperm.xlu0 %380, %v371
    %v382 = vpop.permute.xlu0 %381
    %385 = vset.pattern.permute.xlu0 0
    %386 = vperm.xlu0 %385, %v372
    %v387 = vpop.permute.xlu0 %386
    %390 = vset.pattern.permute.xlu0 0
    %391 = vperm.xlu0 %390, %v373
    %v392 = vpop.permute.xlu0 %391
    %v398 = vunpack.c.l.b16 %v363
    %v399 = vunpack.c.l.b16 %v364
    %v400 = vunpack.c.l.b16 %v365
    %v401 = vunpack.c.l.b16 %v366
    %v402 = vpack.c.b16 %v399, %v398
    %v403 = vpack.c.b16 %v401, %v400
    %v405 = vsel %vm86, %v402, 0
    %v408 = vsel %vm86, %v403, 0
    %410 = vmatprep.subr.bf16.mxu0 0
    %411 = vmatpush1.bf16.msra.mxu0 %v367
    %412 = vmatprep.subr.bf16.mxu0 0
    %413 = vmatpush1.bf16.msra.mxu0 %v368
    %414 = vmatprep.subr.bf16.mxu0 0
    %415 = vmatpush1.bf16.msra.mxu0 0
    %416 = vmatprep.subr.bf16.mxu0 0
    %417 = vmatpush1.bf16.msra.mxu0 0
    %418 = vmatprep.subr.bf16.mxu0 0
    %419 = vmatpush1.bf16.msra.mxu0 0
    %420 = vmatprep.subr.bf16.mxu0 0
    %421 = vmatpush1.bf16.msra.mxu0 0
    %422 = vmatprep.subr.bf16.mxu0 0
    %423 = vmatpush1.bf16.msra.mxu0 0
    %424 = vmatprep.subr.bf16.mxu0 0
    %425 = vmatpush1.bf16.msra.mxu0 0
    %426 = vmatprep.subr.bf16.mxu0 0
    %427 = vmatpush1.bf16.msra.mxu0 0
    %428 = vmatprep.subr.bf16.mxu0 0
    %429 = vmatpush1.bf16.msra.mxu0 0
    %430 = vmatprep.subr.bf16.mxu0 0
    %431 = vmatpush1.bf16.msra.mxu0 0
    %432 = vmatprep.subr.bf16.mxu0 0
    %433 = vmatpush1.bf16.msra.mxu0 0
    %434 = vmatprep.subr.bf16.mxu0 0
    %435 = vmatpush1.bf16.msra.mxu0 0
    %436 = vmatprep.subr.bf16.mxu0 0
    %437 = vmatpush1.bf16.msra.mxu0 0
    %438 = vmatprep.subr.bf16.mxu0 0
    %439 = vmatpush1.bf16.msra.mxu0 0
    %440 = vmatprep.subr.bf16.mxu0 0
    %441 = vmatpush1.bf16.msra.mxu0 0
    %442 = vmatprep.mubr.bf16.mxu0 0
    %443 = vmatmul.mubr.bf16.gmra.mrb[0].mxu0 %v405
    %v444 = vpop.f32.mrb[0].mxu0
    %v445 = vadd.f32 %v377, %v444
    %v446 = vpop.f32.mrb[0].mxu0
    %v447 = vpop.f32.mrb[0].mxu0
    %v448 = vadd.f32 %v382, %v447
    %v449 = vpop.f32.mrb[0].mxu0
    %450 = vmatprep.mubr.bf16.mxu0 0
    %451 = vmatmul.mubr.bf16.gmra.mrb[0].mxu0 %v408
    %v452 = vpop.f32.mrb[0].mxu0
    %v453 = vadd.f32 %v387, %v452
    %v454 = vpop.f32.mrb[0].mxu0
    %v455 = vpop.f32.mrb[0].mxu0
    %v456 = vadd.f32 %v392, %v455
    %v457 = vpop.f32.mrb[0].mxu0
    %458 = vdwg.mxu0
    %v459 = vmul.f32 %v445, 0.2
    %v460 = vmul.f32 %v448, 0.2
    %v461 = vmul.f32 %v453, 0.2
    %v462 = vmul.f32 %v456, 0.2
    %v463 = vmax.f32 %v445, %v459
    %v464 = vmax.f32 %v448, %v460
    %v465 = vmax.f32 %v453, %v461
    %v466 = vmax.f32 %v456, %v462
    %v467 = vadd.f32 %v253, %v463
    %v468 = vadd.f32 %v254, %v464
    %v469 = vadd.f32 %v255, %v465
    %v470 = vadd.f32 %v256, %v466
    %v471 = vld [vmem:[%s5] sm:$0xf]
    %v472 = vld [vmem:[%s5 + $0x4] sm:$0xf]
    %v473 = vpack.c.bf16 %v468, %v467
    %v474 = vpack.c.bf16 %v470, %v469
    %v475 = vld [vmem:[%s6] sm:$0xff]
    %v476 = vld [vmem:[%s6 + $0x8] sm:$0xff]
    %478 = vset.pattern.permute.xlu0 0
    %479 = vperm.xlu0 %478, %v475
    %v480 = vpop.permute.xlu0 %479
    %483 = vset.pattern.permute.xlu0 0
    %484 = vperm.xlu0 %483, %v476
    %v485 = vpop.permute.xlu0 %484
    %v489 = vunpack.c.l.b16 %v471
    %v490 = vunpack.c.l.b16 %v472
    %v491 = vpack.c.b16 %v490, %v489
    %v493 = vsel %vm86, %v491, 0
    %495 = vmatprep.subr.bf16.mxu0 0
    %496 = vmatpush1.bf16.msra.mxu0 %v473
    %497 = vmatprep.subr.bf16.mxu0 0
    %498 = vmatpush1.bf16.msra.mxu0 %v474
    %499 = vmatprep.subr.bf16.mxu0 0
    %500 = vmatpush1.bf16.msra.mxu0 0
    %501 = vmatprep.subr.bf16.mxu0 0
    %502 = vmatpush1.bf16.msra.mxu0 0
    %503 = vmatprep.subr.bf16.mxu0 0
    %504 = vmatpush1.bf16.msra.mxu0 0
    %505 = vmatprep.subr.bf16.mxu0 0
    %506 = vmatpush1.bf16.msra.mxu0 0
    %507 = vmatprep.subr.bf16.mxu0 0
    %508 = vmatpush1.bf16.msra.mxu0 0
    %509 = vmatprep.subr.bf16.mxu0 0
    %510 = vmatpush1.bf16.msra.mxu0 0
    %511 = vmatprep.subr.bf16.mxu0 0
    %512 = vmatpush1.bf16.msra.mxu0 0
    %513 = vmatprep.subr.bf16.mxu0 0
    %514 = vmatpush1.bf16.msra.mxu0 0
    %515 = vmatprep.subr.bf16.mxu0 0
    %516 = vmatpush1.bf16.msra.mxu0 0
    %517 = vmatprep.subr.bf16.mxu0 0
    %518 = vmatpush1.bf16.msra.mxu0 0
    %519 = vmatprep.subr.bf16.mxu0 0
    %520 = vmatpush1.bf16.msra.mxu0 0
    %521 = vmatprep.subr.bf16.mxu0 0
    %522 = vmatpush1.bf16.msra.mxu0 0
    %523 = vmatprep.subr.bf16.mxu0 0
    %524 = vmatpush1.bf16.msra.mxu0 0
    %525 = vmatprep.subr.bf16.mxu0 0
    %526 = vmatpush1.bf16.msra.mxu0 0
    %527 = vmatprep.mubr.bf16.mxu0 0
    %528 = vmatmul.mubr.bf16.gmra.mrb[0].mxu0 %v493
    %v529 = vpop.f32.mrb[0].mxu0
    %v530 = vadd.f32 %v480, %v529
    %v531 = vpop.f32.mrb[0].mxu0
    %v532 = vpop.f32.mrb[0].mxu0
    %v533 = vadd.f32 %v485, %v532
    %v534 = vpop.f32.mrb[0].mxu0
    %535 = vdwg.mxu0
    %v536 = vpack.c.bf16 %v533, %v530
    %v538 = vunpack.c.l.b16 %v536
    %v539 = vunpack.c.h.b16 %v536
    %v540 = vpack.c.b16 %v538, %v538
    %v541 = vpack.c.b16 %v539, %v539
    %544 = vst [vmem:[#allocation2] sm:$0xf] %v540
    %545 = vst [vmem:[#allocation2 + $0x4] sm:$0xf] %v541
    // Predicated region
    $region30: #{tpu_custom_call.1} parent=1 // pred_check
      _
    $region31: #{tpu_custom_call.1} parent=1 // pred_check_branch
      %547 = sbr.rel (0) target = $region33
    $region32: #{tpu_custom_call.1} parent=1 // pred_region
      %s549 = ssub.s32 128, 128
      %550 = vsyncadd [#allocation3], %s549
      %s551 = sshll.u32 [#allocation2], 4
      %s552 = int_to_ptr.vmem [resolvable:$true] %s551
      %557 = dma.vmem_to_hbm [thread:$0]  %s552, 128, %s7, [#allocation3], 64, 64, 4
    $region33: #{tpu_custom_call.1} parent=1 // pred_fallthru
      _
    // Predicated region
    $region34: #{tpu_custom_call.1} parent=1 // pred_check
      _
    $region35: #{tpu_custom_call.1} parent=1 // pred_check_branch
      %559 = sbr.rel (0) target = $region37
    $region36: #{tpu_custom_call.1} parent=1 // pred_region
      %560 = dma.done [#allocation3], 128
    $region37: #{tpu_custom_call.1} parent=1 // pred_fallthru
      _
    %561 = vsyncpa [#allocation3], 1

</llo_original>
